<compile_context>
chip_gen: v5e
topology: v5e:2x2
jax: 0.10.0
libtpu: 0.0.40
codegen_flags: <defaults>
</compile_context>

<pallas_src>
import functools

import jax
import jax.numpy as jnp
from jax.experimental import pallas as pl
from jax.experimental.pallas import tpu as pltpu


def _crypto_lstm_kernel(x_ref, h0_ref, c0_ref,
                        w_ih_ref, w_hh_ref, b_g_ref,
                        w1_ref, b1_ref, w2_ref, b2_ref,
                        out_ref, *, batch, seq_len, hidden_size):
    """Runs the full LSTM recurrence + FC head on one VMEM-resident block."""
    B, T, H = batch, seq_len, hidden_size

    # --- Hoisted input projection (no serial dependence on h/c) -----------
    # One (B*T, I) x (I, 4H) matmul + bias, computed once, off the critical
    # path of the recurrence.
    xw = (jnp.dot(x_ref[...], w_ih_ref[...],
                  preferred_element_type=jnp.float32)
          + b_g_ref[...])                       # (B*T, 4H)
    xw = xw.reshape(B, T, 4 * H)                # layout-preserving split

    w_hh = w_hh_ref[...]                        # (H, 4H)
    h = h0_ref[...]                             # (B, H) f32
    c = c0_ref[...]                             # (B, H) f32

    # --- Fully unrolled recurrence (T is a compile-time constant) ---------
    for t in range(T):
        gates = (jnp.dot(h, w_hh, preferred_element_type=jnp.float32)
                 + xw[:, t, :])                 # (B, 4H)
        # Full-width (B, 4H = 128-lane) activations, then static slices.
        sg = jax.nn.sigmoid(gates)
        th = jnp.tanh(gates)
        i_g = sg[:, 0 * H:1 * H]
        f_g = sg[:, 1 * H:2 * H]
        o_g = sg[:, 3 * H:4 * H]
        g_g = th[:, 2 * H:3 * H]
        c = f_g * c + i_g * g_g
        h = o_g * jnp.tanh(c)

    # --- fc1 -> sigmoid -> fc2 -> sigmoid ----------------------------------
    z1 = jax.nn.sigmoid(
        jnp.dot(h, w1_ref[...], preferred_element_type=jnp.float32)
        + b1_ref[...])                          # (B, H//2)
    z2 = jax.nn.sigmoid(
        jnp.dot(z1, w2_ref[...], preferred_element_type=jnp.float32)
        + b2_ref[...])                          # (B, out)
    out_ref[...] = z2.astype(out_ref.dtype)


def crypto_lstm_forward(x, hidden, params):
    """x: (B, T, I) float32 (batch_first, like the PyTorch module).
    hidden: (h0, c0), each (1, B, H).  Returns (out (B, out_dim), hidden)."""
    h0, c0 = hidden
    B, T, I = x.shape
    H = params["w_hh"].shape[0]

    # Free, contiguous view (no transpose): rows are (b0t0..b0t_{T-1}, b1t0..).
    x_flat = x.reshape(B * T, I)
    h0_2d = h0.reshape(B, H)
    c0_2d = c0.reshape(B, H)

    b_gates = (params["b_ih"] + params["b_hh"]).reshape(1, 4 * H)
    b1 = params["b1"].reshape(1, -1)
    b2 = params["b2"].reshape(1, -1)
    out_dim = params["w2"].shape[1]

    vmem = pl.BlockSpec(memory_space=pltpu.MemorySpace.VMEM)
    kernel = functools.partial(_crypto_lstm_kernel,
                               batch=B, seq_len=T, hidden_size=H)

    out = pl.pallas_call(
        kernel,
        out_shape=jax.ShapeDtypeStruct((B, out_dim), jnp.float32),
        in_specs=[vmem] * 10,
        out_specs=vmem,
    )(x_flat, h0_2d, c0_2d,
      params["w_ih"], params["w_hh"], b_gates,
      params["w1"], b1, params["w2"], b2)

    # The original forward returns the hidden state it was given, unchanged.
    return out, hidden


def init_params(key, input_size, hidden_size, output_size=1):
    """Deterministic PyTorch-style uniform(-1/sqrt(H), 1/sqrt(H)) init.
    All matmul weights stored as (in_features, out_features)."""
    H, I = hidden_size, input_size
    k = 1.0 / jnp.sqrt(jnp.float32(H))
    keys = jax.random.split(key, 8)
    u = lambda kk, shape: jax.random.uniform(kk, shape, jnp.float32, -k, k)
    return {
        "w_ih": u(keys[0], (I, 4 * H)),
        "w_hh": u(keys[1], (H, 4 * H)),
        "b_ih": u(keys[2], (4 * H,)),
        "b_hh": u(keys[3], (4 * H,)),
        "w1":   u(keys[4], (H, H // 2)),
        "b1":   u(keys[5], (H // 2,)),
        "w2":   u(keys[6], (H // 2, output_size)),
        "b2":   u(keys[7], (output_size,)),
    }


def _reference_forward(x, hidden, params):
    """Pure-JAX reference of the same forward pass, for a sanity check."""
    h0, c0 = hidden
    B, T, I = x.shape
    H = params["w_hh"].shape[0]
    h = h0.reshape(B, H)
    c = c0.reshape(B, H)
    b_g = params["b_ih"] + params["b_hh"]
    for t in range(T):
        g = x[:, t, :] @ params["w_ih"] + h @ params["w_hh"] + b_g
        i_g = jax.nn.sigmoid(g[:, 0 * H:1 * H])
        f_g = jax.nn.sigmoid(g[:, 1 * H:2 * H])
        g_g = jnp.tanh(g[:, 2 * H:3 * H])
        o_g = jax.nn.sigmoid(g[:, 3 * H:4 * H])
        c = f_g * c + i_g * g_g
        h = o_g * jnp.tanh(c)
    z1 = jax.nn.sigmoid(h @ params["w1"] + params["b1"])
    z2 = jax.nn.sigmoid(z1 @ params["w2"] + params["b2"])
    return z2


if __name__ == "__main__":
    B, T, INPUT, HIDDEN, OUT = 2, 8, 4, 32, 1

    key = jax.random.PRNGKey(0)
    kx, kp = jax.random.split(key)
    x = jax.random.normal(kx, (B, T, INPUT), dtype=jnp.float32)
    h0 = jnp.zeros((1, B, HIDDEN), dtype=jnp.float32)
    c0 = jnp.zeros((1, B, HIDDEN), dtype=jnp.float32)
    params = init_params(kp, INPUT, HIDDEN, OUT)

    out, hidden = crypto_lstm_forward(x, (h0, c0), params)
    out = jax.block_until_ready(out)

    ref = _reference_forward(x, (h0, c0), params)
    assert out.shape == (B, OUT)
    assert jnp.allclose(out, ref, atol=1e-5, rtol=1e-5), (out, ref)

    print("KERNEL_OK")
</pallas_src>

<mosaic_0001>
module attributes {stable_mosaic.version = 11 : i64} {
  func.func @_crypto_lstm_kernel(%arg0: memref<16x4xf32, #tpu.memory_space<vmem>>, %arg1: memref<2x32xf32, #tpu.memory_space<vmem>>, %arg2: memref<2x32xf32, #tpu.memory_space<vmem>>, %arg3: memref<4x128xf32, #tpu.memory_space<vmem>>, %arg4: memref<32x128xf32, #tpu.memory_space<vmem>>, %arg5: memref<1x128xf32, #tpu.memory_space<vmem>>, %arg6: memref<32x16xf32, #tpu.memory_space<vmem>>, %arg7: memref<1x16xf32, #tpu.memory_space<vmem>>, %arg8: memref<16x1xf32, #tpu.memory_space<vmem>>, %arg9: memref<1x1xf32, #tpu.memory_space<vmem>>, %arg10: memref<2x1xf32, #tpu.memory_space<vmem>>) attributes {dimension_semantics = [], scalar_prefetch = 0 : i64, scratch_operands = 0 : i64, tpu.core_type = #tpu.core_type<tc>} {
    %c0 = arith.constant 0 : index
    %c0_0 = arith.constant 0 : index
    %0 = vector.load %arg0[%c0, %c0_0] : memref<16x4xf32, #tpu.memory_space<vmem>>, vector<16x4xf32>
    %c0_1 = arith.constant 0 : index
    %c0_2 = arith.constant 0 : index
    %1 = vector.load %arg3[%c0_1, %c0_2] : memref<4x128xf32, #tpu.memory_space<vmem>>, vector<4x128xf32>
    %cst = arith.constant dense<0.000000e+00> : vector<16x128xf32>
    %2 = tpu.matmul %0, %1, %cst {dimension_numbers = #tpu.dot_dimension_numbers<[1], [0], [0], [1], [0, 0, 1, 1], [], []>} : vector<16x4xf32>, vector<4x128xf32>, vector<16x128xf32> -> vector<16x128xf32>
    %c0_3 = arith.constant 0 : index
    %c0_4 = arith.constant 0 : index
    %3 = vector.load %arg5[%c0_3, %c0_4] : memref<1x128xf32, #tpu.memory_space<vmem>>, vector<1x128xf32>
    %4 = vector.broadcast %3 : vector<1x128xf32> to vector<16x128xf32>
    %5 = arith.addf %2, %4 : vector<16x128xf32>
    %6 = vector.shape_cast %5 : vector<16x128xf32> to vector<2x8x128xf32>
    %c0_5 = arith.constant 0 : index
    %c0_6 = arith.constant 0 : index
    %7 = vector.load %arg4[%c0_5, %c0_6] : memref<32x128xf32, #tpu.memory_space<vmem>>, vector<32x128xf32>
    %c0_7 = arith.constant 0 : index
    %c0_8 = arith.constant 0 : index
    %8 = vector.load %arg1[%c0_7, %c0_8] : memref<2x32xf32, #tpu.memory_space<vmem>>, vector<2x32xf32>
    %c0_9 = arith.constant 0 : index
    %c0_10 = arith.constant 0 : index
    %9 = vector.load %arg2[%c0_9, %c0_10] : memref<2x32xf32, #tpu.memory_space<vmem>>, vector<2x32xf32>
    %cst_11 = arith.constant dense<0.000000e+00> : vector<2x128xf32>
    %10 = tpu.matmul %8, %7, %cst_11 {dimension_numbers = #tpu.dot_dimension_numbers<[1], [0], [0], [1], [0, 0, 1, 1], [], []>} : vector<2x32xf32>, vector<32x128xf32>, vector<2x128xf32> -> vector<2x128xf32>
    %11 = vector.extract_strided_slice %6 {offsets = [0, 0, 0], sizes = [2, 1, 128], strides = [1, 1, 1]} : vector<2x8x128xf32> to vector<2x1x128xf32>
    %12 = vector.shape_cast %11 : vector<2x1x128xf32> to vector<2x128xf32>
    %13 = arith.addf %10, %12 : vector<2x128xf32>
    %14 = arith.negf %13 : vector<2x128xf32>
    %15 = math.exp %14 : vector<2x128xf32>
    %cst_12 = arith.constant 1.000000e+00 : f32
    %16 = vector.broadcast %cst_12 : f32 to vector<2x128xf32>
    %17 = arith.addf %16, %15 : vector<2x128xf32>
    %18 = arith.divf %16, %17 : vector<2x128xf32>
    %19 = math.tanh %13 : vector<2x128xf32>
    %20 = vector.extract_strided_slice %18 {offsets = [0, 0], sizes = [2, 32], strides = [1, 1]} : vector<2x128xf32> to vector<2x32xf32>
    %21 = vector.extract_strided_slice %18 {offsets = [0, 32], sizes = [2, 32], strides = [1, 1]} : vector<2x128xf32> to vector<2x32xf32>
    %22 = vector.extract_strided_slice %18 {offsets = [0, 96], sizes = [2, 32], strides = [1, 1]} : vector<2x128xf32> to vector<2x32xf32>
    %23 = vector.extract_strided_slice %19 {offsets = [0, 64], sizes = [2, 32], strides = [1, 1]} : vector<2x128xf32> to vector<2x32xf32>
    %24 = arith.mulf %21, %9 : vector<2x32xf32>
    %25 = arith.mulf %20, %23 : vector<2x32xf32>
    %26 = arith.addf %24, %25 : vector<2x32xf32>
    %27 = math.tanh %26 : vector<2x32xf32>
    %28 = arith.mulf %22, %27 : vector<2x32xf32>
    %cst_13 = arith.constant dense<0.000000e+00> : vector<2x128xf32>
    %29 = tpu.matmul %28, %7, %cst_13 {dimension_numbers = #tpu.dot_dimension_numbers<[1], [0], [0], [1], [0, 0, 1, 1], [], []>} : vector<2x32xf32>, vector<32x128xf32>, vector<2x128xf32> -> vector<2x128xf32>
    %30 = vector.extract_strided_slice %6 {offsets = [0, 1, 0], sizes = [2, 1, 128], strides = [1, 1, 1]} : vector<2x8x128xf32> to vector<2x1x128xf32>
    %31 = vector.shape_cast %30 : vector<2x1x128xf32> to vector<2x128xf32>
    %32 = arith.addf %29, %31 : vector<2x128xf32>
    %33 = arith.negf %32 : vector<2x128xf32>
    %34 = math.exp %33 : vector<2x128xf32>
    %cst_14 = arith.constant 1.000000e+00 : f32
    %35 = vector.broadcast %cst_14 : f32 to vector<2x128xf32>
    %36 = arith.addf %35, %34 : vector<2x128xf32>
    %37 = arith.divf %35, %36 : vector<2x128xf32>
    %38 = math.tanh %32 : vector<2x128xf32>
    %39 = vector.extract_strided_slice %37 {offsets = [0, 0], sizes = [2, 32], strides = [1, 1]} : vector<2x128xf32> to vector<2x32xf32>
    %40 = vector.extract_strided_slice %37 {offsets = [0, 32], sizes = [2, 32], strides = [1, 1]} : vector<2x128xf32> to vector<2x32xf32>
    %41 = vector.extract_strided_slice %37 {offsets = [0, 96], sizes = [2, 32], strides = [1, 1]} : vector<2x128xf32> to vector<2x32xf32>
    %42 = vector.extract_strided_slice %38 {offsets = [0, 64], sizes = [2, 32], strides = [1, 1]} : vector<2x128xf32> to vector<2x32xf32>
    %43 = arith.mulf %40, %26 : vector<2x32xf32>
    %44 = arith.mulf %39, %42 : vector<2x32xf32>
    %45 = arith.addf %43, %44 : vector<2x32xf32>
    %46 = math.tanh %45 : vector<2x32xf32>
    %47 = arith.mulf %41, %46 : vector<2x32xf32>
    %cst_15 = arith.constant dense<0.000000e+00> : vector<2x128xf32>
    %48 = tpu.matmul %47, %7, %cst_15 {dimension_numbers = #tpu.dot_dimension_numbers<[1], [0], [0], [1], [0, 0, 1, 1], [], []>} : vector<2x32xf32>, vector<32x128xf32>, vector<2x128xf32> -> vector<2x128xf32>
    %49 = vector.extract_strided_slice %6 {offsets = [0, 2, 0], sizes = [2, 1, 128], strides = [1, 1, 1]} : vector<2x8x128xf32> to vector<2x1x128xf32>
    %50 = vector.shape_cast %49 : vector<2x1x128xf32> to vector<2x128xf32>
    %51 = arith.addf %48, %50 : vector<2x128xf32>
    %52 = arith.negf %51 : vector<2x128xf32>
    %53 = math.exp %52 : vector<2x128xf32>
    %cst_16 = arith.constant 1.000000e+00 : f32
    %54 = vector.broadcast %cst_16 : f32 to vector<2x128xf32>
    %55 = arith.addf %54, %53 : vector<2x128xf32>
    %56 = arith.divf %54, %55 : vector<2x128xf32>
    %57 = math.tanh %51 : vector<2x128xf32>
    %58 = vector.extract_strided_slice %56 {offsets = [0, 0], sizes = [2, 32], strides = [1, 1]} : vector<2x128xf32> to vector<2x32xf32>
    %59 = vector.extract_strided_slice %56 {offsets = [0, 32], sizes = [2, 32], strides = [1, 1]} : vector<2x128xf32> to vector<2x32xf32>
    %60 = vector.extract_strided_slice %56 {offsets = [0, 96], sizes = [2, 32], strides = [1, 1]} : vector<2x128xf32> to vector<2x32xf32>
    %61 = vector.extract_strided_slice %57 {offsets = [0, 64], sizes = [2, 32], strides = [1, 1]} : vector<2x128xf32> to vector<2x32xf32>
    %62 = arith.mulf %59, %45 : vector<2x32xf32>
    %63 = arith.mulf %58, %61 : vector<2x32xf32>
    %64 = arith.addf %62, %63 : vector<2x32xf32>
    %65 = math.tanh %64 : vector<2x32xf32>
    %66 = arith.mulf %60, %65 : vector<2x32xf32>
    %cst_17 = arith.constant dense<0.000000e+00> : vector<2x128xf32>
    %67 = tpu.matmul %66, %7, %cst_17 {dimension_numbers = #tpu.dot_dimension_numbers<[1], [0], [0], [1], [0, 0, 1, 1], [], []>} : vector<2x32xf32>, vector<32x128xf32>, vector<2x128xf32> -> vector<2x128xf32>
    %68 = vector.extract_strided_slice %6 {offsets = [0, 3, 0], sizes = [2, 1, 128], strides = [1, 1, 1]} : vector<2x8x128xf32> to vector<2x1x128xf32>
    %69 = vector.shape_cast %68 : vector<2x1x128xf32> to vector<2x128xf32>
    %70 = arith.addf %67, %69 : vector<2x128xf32>
    %71 = arith.negf %70 : vector<2x128xf32>
    %72 = math.exp %71 : vector<2x128xf32>
    %cst_18 = arith.constant 1.000000e+00 : f32
    %73 = vector.broadcast %cst_18 : f32 to vector<2x128xf32>
    %74 = arith.addf %73, %72 : vector<2x128xf32>
    %75 = arith.divf %73, %74 : vector<2x128xf32>
    %76 = math.tanh %70 : vector<2x128xf32>
    %77 = vector.extract_strided_slice %75 {offsets = [0, 0], sizes = [2, 32], strides = [1, 1]} : vector<2x128xf32> to vector<2x32xf32>
    %78 = vector.extract_strided_slice %75 {offsets = [0, 32], sizes = [2, 32], strides = [1, 1]} : vector<2x128xf32> to vector<2x32xf32>
    %79 = vector.extract_strided_slice %75 {offsets = [0, 96], sizes = [2, 32], strides = [1, 1]} : vector<2x128xf32> to vector<2x32xf32>
    %80 = vector.extract_strided_slice %76 {offsets = [0, 64], sizes = [2, 32], strides = [1, 1]} : vector<2x128xf32> to vector<2x32xf32>
    %81 = arith.mulf %78, %64 : vector<2x32xf32>
    %82 = arith.mulf %77, %80 : vector<2x32xf32>
    %83 = arith.addf %81, %82 : vector<2x32xf32>
    %84 = math.tanh %83 : vector<2x32xf32>
    %85 = arith.mulf %79, %84 : vector<2x32xf32>
    %cst_19 = arith.constant dense<0.000000e+00> : vector<2x128xf32>
    %86 = tpu.matmul %85, %7, %cst_19 {dimension_numbers = #tpu.dot_dimension_numbers<[1], [0], [0], [1], [0, 0, 1, 1], [], []>} : vector<2x32xf32>, vector<32x128xf32>, vector<2x128xf32> -> vector<2x128xf32>
    %87 = vector.extract_strided_slice %6 {offsets = [0, 4, 0], sizes = [2, 1, 128], strides = [1, 1, 1]} : vector<2x8x128xf32> to vector<2x1x128xf32>
    %88 = vector.shape_cast %87 : vector<2x1x128xf32> to vector<2x128xf32>
    %89 = arith.addf %86, %88 : vector<2x128xf32>
    %90 = arith.negf %89 : vector<2x128xf32>
    %91 = math.exp %90 : vector<2x128xf32>
    %cst_20 = arith.constant 1.000000e+00 : f32
    %92 = vector.broadcast %cst_20 : f32 to vector<2x128xf32>
    %93 = arith.addf %92, %91 : vector<2x128xf32>
    %94 = arith.divf %92, %93 : vector<2x128xf32>
    %95 = math.tanh %89 : vector<2x128xf32>
    %96 = vector.extract_strided_slice %94 {offsets = [0, 0], sizes = [2, 32], strides = [1, 1]} : vector<2x128xf32> to vector<2x32xf32>
    %97 = vector.extract_strided_slice %94 {offsets = [0, 32], sizes = [2, 32], strides = [1, 1]} : vector<2x128xf32> to vector<2x32xf32>
    %98 = vector.extract_strided_slice %94 {offsets = [0, 96], sizes = [2, 32], strides = [1, 1]} : vector<2x128xf32> to vector<2x32xf32>
    %99 = vector.extract_strided_slice %95 {offsets = [0, 64], sizes = [2, 32], strides = [1, 1]} : vector<2x128xf32> to vector<2x32xf32>
    %100 = arith.mulf %97, %83 : vector<2x32xf32>
    %101 = arith.mulf %96, %99 : vector<2x32xf32>
    %102 = arith.addf %100, %101 : vector<2x32xf32>
    %103 = math.tanh %102 : vector<2x32xf32>
    %104 = arith.mulf %98, %103 : vector<2x32xf32>
    %cst_21 = arith.constant dense<0.000000e+00> : vector<2x128xf32>
    %105 = tpu.matmul %104, %7, %cst_21 {dimension_numbers = #tpu.dot_dimension_numbers<[1], [0], [0], [1], [0, 0, 1, 1], [], []>} : vector<2x32xf32>, vector<32x128xf32>, vector<2x128xf32> -> vector<2x128xf32>
    %106 = vector.extract_strided_slice %6 {offsets = [0, 5, 0], sizes = [2, 1, 128], strides = [1, 1, 1]} : vector<2x8x128xf32> to vector<2x1x128xf32>
    %107 = vector.shape_cast %106 : vector<2x1x128xf32> to vector<2x128xf32>
    %108 = arith.addf %105, %107 : vector<2x128xf32>
    %109 = arith.negf %108 : vector<2x128xf32>
    %110 = math.exp %109 : vector<2x128xf32>
    %cst_22 = arith.constant 1.000000e+00 : f32
    %111 = vector.broadcast %cst_22 : f32 to vector<2x128xf32>
    %112 = arith.addf %111, %110 : vector<2x128xf32>
    %113 = arith.divf %111, %112 : vector<2x128xf32>
    %114 = math.tanh %108 : vector<2x128xf32>
    %115 = vector.extract_strided_slice %113 {offsets = [0, 0], sizes = [2, 32], strides = [1, 1]} : vector<2x128xf32> to vector<2x32xf32>
    %116 = vector.extract_strided_slice %113 {offsets = [0, 32], sizes = [2, 32], strides = [1, 1]} : vector<2x128xf32> to vector<2x32xf32>
    %117 = vector.extract_strided_slice %113 {offsets = [0, 96], sizes = [2, 32], strides = [1, 1]} : vector<2x128xf32> to vector<2x32xf32>
    %118 = vector.extract_strided_slice %114 {offsets = [0, 64], sizes = [2, 32], strides = [1, 1]} : vector<2x128xf32> to vector<2x32xf32>
    %119 = arith.mulf %116, %102 : vector<2x32xf32>
    %120 = arith.mulf %115, %118 : vector<2x32xf32>
    %121 = arith.addf %119, %120 : vector<2x32xf32>
    %122 = math.tanh %121 : vector<2x32xf32>
    %123 = arith.mulf %117, %122 : vector<2x32xf32>
    %cst_23 = arith.constant dense<0.000000e+00> : vector<2x128xf32>
    %124 = tpu.matmul %123, %7, %cst_23 {dimension_numbers = #tpu.dot_dimension_numbers<[1], [0], [0], [1], [0, 0, 1, 1], [], []>} : vector<2x32xf32>, vector<32x128xf32>, vector<2x128xf32> -> vector<2x128xf32>
    %125 = vector.extract_strided_slice %6 {offsets = [0, 6, 0], sizes = [2, 1, 128], strides = [1, 1, 1]} : vector<2x8x128xf32> to vector<2x1x128xf32>
    %126 = vector.shape_cast %125 : vector<2x1x128xf32> to vector<2x128xf32>
    %127 = arith.addf %124, %126 : vector<2x128xf32>
    %128 = arith.negf %127 : vector<2x128xf32>
    %129 = math.exp %128 : vector<2x128xf32>
    %cst_24 = arith.constant 1.000000e+00 : f32
    %130 = vector.broadcast %cst_24 : f32 to vector<2x128xf32>
    %131 = arith.addf %130, %129 : vector<2x128xf32>
    %132 = arith.divf %130, %131 : vector<2x128xf32>
    %133 = math.tanh %127 : vector<2x128xf32>
    %134 = vector.extract_strided_slice %132 {offsets = [0, 0], sizes = [2, 32], strides = [1, 1]} : vector<2x128xf32> to vector<2x32xf32>
    %135 = vector.extract_strided_slice %132 {offsets = [0, 32], sizes = [2, 32], strides = [1, 1]} : vector<2x128xf32> to vector<2x32xf32>
    %136 = vector.extract_strided_slice %132 {offsets = [0, 96], sizes = [2, 32], strides = [1, 1]} : vector<2x128xf32> to vector<2x32xf32>
    %137 = vector.extract_strided_slice %133 {offsets = [0, 64], sizes = [2, 32], strides = [1, 1]} : vector<2x128xf32> to vector<2x32xf32>
    %138 = arith.mulf %135, %121 : vector<2x32xf32>
    %139 = arith.mulf %134, %137 : vector<2x32xf32>
    %140 = arith.addf %138, %139 : vector<2x32xf32>
    %141 = math.tanh %140 : vector<2x32xf32>
    %142 = arith.mulf %136, %141 : vector<2x32xf32>
    %cst_25 = arith.constant dense<0.000000e+00> : vector<2x128xf32>
    %143 = tpu.matmul %142, %7, %cst_25 {dimension_numbers = #tpu.dot_dimension_numbers<[1], [0], [0], [1], [0, 0, 1, 1], [], []>} : vector<2x32xf32>, vector<32x128xf32>, vector<2x128xf32> -> vector<2x128xf32>
    %144 = vector.extract_strided_slice %6 {offsets = [0, 7, 0], sizes = [2, 1, 128], strides = [1, 1, 1]} : vector<2x8x128xf32> to vector<2x1x128xf32>
    %145 = vector.shape_cast %144 : vector<2x1x128xf32> to vector<2x128xf32>
    %146 = arith.addf %143, %145 : vector<2x128xf32>
    %147 = arith.negf %146 : vector<2x128xf32>
    %148 = math.exp %147 : vector<2x128xf32>
    %cst_26 = arith.constant 1.000000e+00 : f32
    %149 = vector.broadcast %cst_26 : f32 to vector<2x128xf32>
    %150 = arith.addf %149, %148 : vector<2x128xf32>
    %151 = arith.divf %149, %150 : vector<2x128xf32>
    %152 = math.tanh %146 : vector<2x128xf32>
    %153 = vector.extract_strided_slice %151 {offsets = [0, 0], sizes = [2, 32], strides = [1, 1]} : vector<2x128xf32> to vector<2x32xf32>
    %154 = vector.extract_strided_slice %151 {offsets = [0, 32], sizes = [2, 32], strides = [1, 1]} : vector<2x128xf32> to vector<2x32xf32>
    %155 = vector.extract_strided_slice %151 {offsets = [0, 96], sizes = [2, 32], strides = [1, 1]} : vector<2x128xf32> to vector<2x32xf32>
    %156 = vector.extract_strided_slice %152 {offsets = [0, 64], sizes = [2, 32], strides = [1, 1]} : vector<2x128xf32> to vector<2x32xf32>
    %157 = arith.mulf %154, %140 : vector<2x32xf32>
    %158 = arith.mulf %153, %156 : vector<2x32xf32>
    %159 = arith.addf %157, %158 : vector<2x32xf32>
    %160 = math.tanh %159 : vector<2x32xf32>
    %161 = arith.mulf %155, %160 : vector<2x32xf32>
    %c0_27 = arith.constant 0 : index
    %c0_28 = arith.constant 0 : index
    %162 = vector.load %arg6[%c0_27, %c0_28] : memref<32x16xf32, #tpu.memory_space<vmem>>, vector<32x16xf32>
    %cst_29 = arith.constant dense<0.000000e+00> : vector<2x16xf32>
    %163 = tpu.matmul %161, %162, %cst_29 {dimension_numbers = #tpu.dot_dimension_numbers<[1], [0], [0], [1], [0, 0, 1, 1], [], []>} : vector<2x32xf32>, vector<32x16xf32>, vector<2x16xf32> -> vector<2x16xf32>
    %c0_30 = arith.constant 0 : index
    %c0_31 = arith.constant 0 : index
    %164 = vector.load %arg7[%c0_30, %c0_31] : memref<1x16xf32, #tpu.memory_space<vmem>>, vector<1x16xf32>
    %165 = vector.broadcast %164 : vector<1x16xf32> to vector<2x16xf32>
    %166 = arith.addf %163, %165 : vector<2x16xf32>
    %167 = arith.negf %166 : vector<2x16xf32>
    %168 = math.exp %167 : vector<2x16xf32>
    %cst_32 = arith.constant 1.000000e+00 : f32
    %169 = vector.broadcast %cst_32 : f32 to vector<2x16xf32>
    %170 = arith.addf %169, %168 : vector<2x16xf32>
    %171 = arith.divf %169, %170 : vector<2x16xf32>
    %c0_33 = arith.constant 0 : index
    %c0_34 = arith.constant 0 : index
    %172 = vector.load %arg8[%c0_33, %c0_34] : memref<16x1xf32, #tpu.memory_space<vmem>>, vector<16x1xf32>
    %cst_35 = arith.constant dense<0.000000e+00> : vector<2x1xf32>
    %173 = tpu.matmul %171, %172, %cst_35 {dimension_numbers = #tpu.dot_dimension_numbers<[1], [0], [0], [1], [0, 0, 1, 1], [], []>} : vector<2x16xf32>, vector<16x1xf32>, vector<2x1xf32> -> vector<2x1xf32>
    %c0_36 = arith.constant 0 : index
    %c0_37 = arith.constant 0 : index
    %174 = vector.load %arg9[%c0_36, %c0_37] : memref<1x1xf32, #tpu.memory_space<vmem>>, vector<1x1xf32>
    %175 = vector.broadcast %174 : vector<1x1xf32> to vector<2x1xf32>
    %176 = arith.addf %173, %175 : vector<2x1xf32>
    %177 = arith.negf %176 : vector<2x1xf32>
    %178 = math.exp %177 : vector<2x1xf32>
    %cst_38 = arith.constant 1.000000e+00 : f32
    %179 = vector.broadcast %cst_38 : f32 to vector<2x1xf32>
    %180 = arith.addf %179, %178 : vector<2x1xf32>
    %181 = arith.divf %179, %180 : vector<2x1xf32>
    %c0_39 = arith.constant 0 : index
    %c0_40 = arith.constant 0 : index
    %182 = vector.load %arg10[%c0_39, %c0_40] : memref<2x1xf32, #tpu.memory_space<vmem>>, vector<2x1xf32>
    tpu.vector_store %arg10[%c0_39, %c0_40], %181 {strides = array<i32>} : memref<2x1xf32, #tpu.memory_space<vmem>>, vector<2x1xf32>,
    return
  }
}

</mosaic_0001>

<llo_original>
// kernel: tpu_custom_call.1
$region0: #{tpu_custom_call.1}
  #allocation0 [shape = 'u32[]', space=smem, size = 0x4, offset = 0x4, fixed_abs, tag = 'smem constant byte address 0x4 - core index']
  #allocation1 [shape = 'u32[72,128]{1,0:T(1,128)}', space=vmem, size = 0x9000, scoped, tag = 'internal scratch']
  #allocation2 [shape = 'f32[1,1]{1,0:T(1,128)S(1)}', space=vmem, size = 0x200, scoped, tag = 'scoped memory for tpu_custom_call.1']
  %s0 = inlined_call_operand.vmem [shape: f32[16,4], index: 0, kind: input, shape index: {}]
  %s1 = inlined_call_operand.vmem [shape: f32[2,32], index: 1, kind: input, shape index: {}]
  %s2 = inlined_call_operand.vmem [shape: f32[2,32], index: 2, kind: input, shape index: {}]
  %s3 = inlined_call_operand.vmem [shape: f32[4,128], index: 3, kind: input, shape index: {}]
  %s4 = inlined_call_operand.vmem [shape: f32[32,128], index: 4, kind: input, shape index: {}]
  %s5 = inlined_call_operand.vmem [shape: f32[1,128], index: 5, kind: input, shape index: {}]
  %s6 = inlined_call_operand.vmem [shape: f32[32,16], index: 6, kind: input, shape index: {}]
  %s7 = inlined_call_operand.vmem [shape: f32[1,16], index: 7, kind: input, shape index: {}]
  %s8 = inlined_call_operand.vmem [shape: f32[16,1], index: 8, kind: input, shape index: {}]
  %s9 = inlined_call_operand.<no memory space> [shape: f32[1,1], index: 9, kind: input, shape index: {}]
  %s10 = inlined_call_operand.vmem [shape: f32[2,1], index: 10, kind: output, shape index: {}]
  %s11 = sld [smem:[#allocation0]]
  $region50: #{tpu_custom_call.1} parent=0
    _
  %s13 = ssub.s32 1, %s11
  %s14 = scalar_select 0, %s13, %s11
  %v15 = vstv %s9
  %16 = vst [vmem:[#allocation2] sm:$0x1] %v15
  // Predicated region
  $region2: #{tpu_custom_call.1} parent=0 // pred_check
    _
  $region3: #{tpu_custom_call.1} parent=0 // pred_check_branch
    %18 = sbr.rel (0) target = $region5
  $region4: #{tpu_custom_call.1} parent=0 // pred_region
    _
  $region5: #{tpu_custom_call.1} parent=0 // pred_fallthru
    _
  // Predicated region
  $region6: #{tpu_custom_call.1} parent=0 // pred_check
    _
  $region7: #{tpu_custom_call.1} parent=0 // pred_check_branch
    %20 = sbr.rel (0) target = $region9
  $region8: #{tpu_custom_call.1} parent=0 // pred_region
    _
  $region9: #{tpu_custom_call.1} parent=0 // pred_fallthru
    _
  // Predicated region
  $region10: #{tpu_custom_call.1} parent=0 // pred_check
    _
  $region11: #{tpu_custom_call.1} parent=0 // pred_check_branch
    %22 = sbr.rel (0) target = $region13
  $region12: #{tpu_custom_call.1} parent=0 // pred_region
    _
  $region13: #{tpu_custom_call.1} parent=0 // pred_fallthru
    _
  // Predicated region
  $region14: #{tpu_custom_call.1} parent=0 // pred_check
    _
  $region15: #{tpu_custom_call.1} parent=0 // pred_check_branch
    %24 = sbr.rel (0) target = $region17
  $region16: #{tpu_custom_call.1} parent=0 // pred_region
    _
  $region17: #{tpu_custom_call.1} parent=0 // pred_fallthru
    _
  // Predicated region
  $region18: #{tpu_custom_call.1} parent=0 // pred_check
    _
  $region19: #{tpu_custom_call.1} parent=0 // pred_check_branch
    %26 = sbr.rel (0) target = $region21
  $region20: #{tpu_custom_call.1} parent=0 // pred_region
    _
  $region21: #{tpu_custom_call.1} parent=0 // pred_fallthru
    _
  // Predicated region
  $region22: #{tpu_custom_call.1} parent=0 // pred_check
    _
  $region23: #{tpu_custom_call.1} parent=0 // pred_check_branch
    %28 = sbr.rel (0) target = $region25
  $region24: #{tpu_custom_call.1} parent=0 // pred_region
    _
  $region25: #{tpu_custom_call.1} parent=0 // pred_fallthru
    _
  // Predicated region
  $region26: #{tpu_custom_call.1} parent=0 // pred_check
    _
  $region27: #{tpu_custom_call.1} parent=0 // pred_check_branch
    %30 = sbr.rel (0) target = $region29
  $region28: #{tpu_custom_call.1} parent=0 // pred_region
    _
  $region29: #{tpu_custom_call.1} parent=0 // pred_fallthru
    _
  // Predicated region
  $region30: #{tpu_custom_call.1} parent=0 // pred_check
    _
  $region31: #{tpu_custom_call.1} parent=0 // pred_check_branch
    %32 = sbr.rel (0) target = $region33
  $region32: #{tpu_custom_call.1} parent=0 // pred_region
    _
  $region33: #{tpu_custom_call.1} parent=0 // pred_fallthru
    _
  // Predicated region
  $region34: #{tpu_custom_call.1} parent=0 // pred_check
    _
  $region35: #{tpu_custom_call.1} parent=0 // pred_check_branch
    %34 = sbr.rel (0) target = $region37
  $region36: #{tpu_custom_call.1} parent=0 // pred_region
    _
  $region37: #{tpu_custom_call.1} parent=0 // pred_fallthru
    _
  // Predicated region
  $region38: #{tpu_custom_call.1} parent=0 // pred_check
    _
  $region39: #{tpu_custom_call.1} parent=0 // pred_check_branch
    %36 = sbr.rel (0) target = $region41
  $region40: #{tpu_custom_call.1} parent=0 // pred_region
    _
  $region41: #{tpu_custom_call.1} parent=0 // pred_fallthru
    _
  %v37 = vld [vmem:[%s0] sm:$0xff]
  %v38 = vld [vmem:[%s0 + $0x8] sm:$0xff]
  %v39 = vld [vmem:[%s3] sm:$0xf]
  %v40 = vld [vmem:[%s5] sm:$0x1]
  %v42 = vperm.slane %v40, 0
  %vm44 = vcmask 31744
  %v46 = vsel %vm44, %v37, 0
  %v49 = vsel %vm44, %v38, 0
  %vm51 = vcmask 1043456
  %v53 = vsel %vm51, %v39, 0
  %55 = vmatpush.msra.mxu0 0.0
  %56 = vmatpush.msra.mxu0 0.0
  %57 = vmatpush.msra.mxu0 0.0
  %58 = vmatpush.msra.mxu0 0.0
  %59 = vmatpush.msra.mxu0 0.0
  %60 = vmatpush.msra.mxu0 0.0
  %61 = vmatpush.msra.mxu0 0.0
  %62 = vmatpush.msra.mxu0 0.0
  %63 = vmatpush.msra.mxu0 0.0
  %64 = vmatpush.msra.mxu0 0.0
  %65 = vmatpush.msra.mxu0 0.0
  %66 = vmatpush.msra.mxu0 0.0
  %67 = vmatpush.msra.mxu0 0.0
  %68 = vmatpush.msra.mxu0 0.0
  %69 = vmatpush.msra.mxu0 0.0
  %70 = vmatpush.msra.mxu0 %v53
  %71 = vmatmul.f32.gmra.mxu0 %v46
  %v72 = vpop.f32.mrf.mxu0
  %v73 = vadd.f32 %v42, %v72
  %74 = vmatmul.f32.gmra.mxu0 %v49
  %v75 = vpop.f32.mrf.mxu0
  %v76 = vadd.f32 %v42, %v75
  %77 = vdwg.mxu0
  %v78 = vld [vmem:[%s4] sm:$0xff]
  %v79 = vld [vmem:[%s4 + $0x8] sm:$0xff]
  %v80 = vld [vmem:[%s4 + $0x10] sm:$0xff]
  %v81 = vld [vmem:[%s4 + $0x18] sm:$0xff]
  %v82 = vld [vmem:[%s1] sm:$0x3]
  %v83 = vld [vmem:[%s2] sm:$0x3]
  %v86 = vrot.slane %v76, 7
  %vm87 = vcmask 1041409
  %v88 = vsel %vm87, %v86, %v73
  %vm90 = vcmask 261120
  %v92 = vsel %vm90, %v82, 0
  %94 = vmatpush.msra.mxu0 0.0
  %95 = vmatpush.msra.mxu0 0.0
  %96 = vmatpush.msra.mxu0 0.0
  %97 = vmatpush.msra.mxu0 0.0
  %98 = vmatpush.msra.mxu0 0.0
  %99 = vmatpush.msra.mxu0 0.0
  %100 = vmatpush.msra.mxu0 0.0
  %101 = vmatpush.msra.mxu0 0.0
  %102 = vmatpush.msra.mxu0 0.0
  %103 = vmatpush.msra.mxu0 0.0
  %104 = vmatpush.msra.mxu0 0.0
  %105 = vmatpush.msra.mxu0 0.0
  %106 = vmatpush.msra.mxu0 %v81
  %107 = vmatpush.msra.mxu0 %v80
  %108 = vmatpush.msra.mxu0 %v79
  %109 = vmatpush.msra.mxu0 %v78
  %110 = vmatmul.f32.gmra.mxu0 %v92
  %v111 = vpop.f32.mrf.mxu0
  %v112 = vadd.f32 %v88, %v111
  %113 = vdwg.mxu0
  %v114 = vxor.u32 %v112, 2147483648
  %v115 = vmul.f32 %v114, 1.442695
  %v116 = vpow.pop %v115
  %v117 = vadd.f32 %v116, 1.0
  %v118 = vrcp.pop %v117
  %v119 = vmul.f32 %v117, %v118
  %v120 = vsub.f32 1.0, %v119
  %v121 = vmul.f32 %v118, %v120
  %v122 = vadd.f32 %v118, %v121
  %vm123 = vweird.f32 %v117
  %vm124 = vweird.f32 %v118
  %vm125 = vmor %vm123, %vm124
  %v126 = vsel %vm125, %v118, %v122
  %v127 = vand.u32 2147483647, %v117
  %vm128 = vcmp.eq.f32.partialorder %v127, 8.507059e+37
  %v129 = vand.u32 %v117, 2147483648
  %v130 = vor.u32 1.1754944e-38, %v129
  %v131 = vsel %vm128, %v130, %v126
  %v132 = vmul.f32 1.0, %v131
  %v133 = vtanh.pop %v112
  %135 = vrot.lane.b32.xlu0 %v83, 32
  %v136 = vpop.permute.xlu0 %135
  %v138 = vmul.f32 %v132, %v136
  %140 = vrot.lane.b32.xlu0 %v133, 64
  %v141 = vpop.permute.xlu0 %140
  %v143 = vmul.f32 %v132, %v141
  %145 = vrot.lane.b32.xlu0 %v143, 32
  %v146 = vpop.permute.xlu0 %145
  %v148 = vadd.f32 %v138, %v146
  %v149 = vtanh.pop %v148
  %151 = vrot.lane.b32.xlu0 %v149, 64
  %v152 = vpop.permute.xlu0 %151
  %v154 = vmul.f32 %v132, %v152
  %156 = vrot.lane.b32.xlu0 %v154, 32
  %v157 = vpop.permute.xlu0 %156
  %v158 = vrot.slane %v73, 1
  %v159 = vsel %vm87, %v76, %v158
  %v161 = vsel %vm90, %v157, 0
  %163 = vmatpush.msra.mxu0 0.0
  %164 = vmatpush.msra.mxu0 0.0
  %165 = vmatpush.msra.mxu0 0.0
  %166 = vmatpush.msra.mxu0 0.0
  %167 = vmatpush.msra.mxu0 0.0
  %168 = vmatpush.msra.mxu0 0.0
  %169 = vmatpush.msra.mxu0 0.0
  %170 = vmatpush.msra.mxu0 0.0
  %171 = vmatpush.msra.mxu0 0.0
  %172 = vmatpush.msra.mxu0 0.0
  %173 = vmatpush.msra.mxu0 0.0
  %174 = vmatpush.msra.mxu0 0.0
  %175 = vmatpush.msra.mxu0 %v81
  %176 = vmatpush.msra.mxu0 %v80
  %177 = vmatpush.msra.mxu0 %v79
  %178 = vmatpush.msra.mxu0 %v78
  %179 = vmatmul.f32.gmra.mxu0 %v161
  %v180 = vpop.f32.mrf.mxu0
  %v181 = vadd.f32 %v159, %v180
  %182 = vdwg.mxu0
  %v183 = vxor.u32 %v181, 2147483648
  %v184 = vmul.f32 %v183, 1.442695
  %v185 = vpow.pop %v184
  %v186 = vadd.f32 %v185, 1.0
  %v187 = vrcp.pop %v186
  %v188 = vmul.f32 %v186, %v187
  %v189 = vsub.f32 1.0, %v188
  %v190 = vmul.f32 %v187, %v189
  %v191 = vadd.f32 %v187, %v190
  %vm192 = vweird.f32 %v186
  %vm193 = vweird.f32 %v187
  %vm194 = vmor %vm192, %vm193
  %v195 = vsel %vm194, %v187, %v191
  %v196 = vand.u32 2147483647, %v186
  %vm197 = vcmp.eq.f32.partialorder %v196, 8.507059e+37
  %v198 = vand.u32 %v186, 2147483648
  %v199 = vor.u32 1.1754944e-38, %v198
  %v200 = vsel %vm197, %v199, %v195
  %v201 = vmul.f32 1.0, %v200
  %v202 = vtanh.pop %v181
  %v203 = vmul.f32 %v201, %v148
  %205 = vrot.lane.b32.xlu0 %v202, 64
  %v206 = vpop.permute.xlu0 %205
  %v208 = vmul.f32 %v201, %v206
  %210 = vrot.lane.b32.xlu0 %v208, 32
  %v211 = vpop.permute.xlu0 %210
  %v213 = vadd.f32 %v203, %v211
  %v214 = vtanh.pop %v213
  %216 = vrot.lane.b32.xlu0 %v214, 64
  %v217 = vpop.permute.xlu0 %216
  %v219 = vmul.f32 %v201, %v217
  %221 = vrot.lane.b32.xlu0 %v219, 32
  %v222 = vpop.permute.xlu0 %221
  %v223 = vrot.slane %v73, 2
  %v224 = vrot.slane %v76, 1
  %v225 = vsel %vm87, %v224, %v223
  %v227 = vsel %vm90, %v222, 0
  %229 = vmatpush.msra.mxu0 0.0
  %230 = vmatpush.msra.mxu0 0.0
  %231 = vmatpush.msra.mxu0 0.0
  %232 = vmatpush.msra.mxu0 0.0
  %233 = vmatpush.msra.mxu0 0.0
  %234 = vmatpush.msra.mxu0 0.0
  %235 = vmatpush.msra.mxu0 0.0
  %236 = vmatpush.msra.mxu0 0.0
  %237 = vmatpush.msra.mxu0 0.0
  %238 = vmatpush.msra.mxu0 0.0
  %239 = vmatpush.msra.mxu0 0.0
  %240 = vmatpush.msra.mxu0 0.0
  %241 = vmatpush.msra.mxu0 %v81
  %242 = vmatpush.msra.mxu0 %v80
  %243 = vmatpush.msra.mxu0 %v79
  %244 = vmatpush.msra.mxu0 %v78
  %245 = vmatmul.f32.gmra.mxu0 %v227
  %v246 = vpop.f32.mrf.mxu0
  %v247 = vadd.f32 %v225, %v246
  %248 = vdwg.mxu0
  %v249 = vxor.u32 %v247, 2147483648
  %v250 = vmul.f32 %v249, 1.442695
  %v251 = vpow.pop %v250
  %v252 = vadd.f32 %v251, 1.0
  %v253 = vrcp.pop %v252
  %v254 = vmul.f32 %v252, %v253
  %v255 = vsub.f32 1.0, %v254
  %v256 = vmul.f32 %v253, %v255
  %v257 = vadd.f32 %v253, %v256
  %vm258 = vweird.f32 %v252
  %vm259 = vweird.f32 %v253
  %vm260 = vmor %vm258, %vm259
  %v261 = vsel %vm260, %v253, %v257
  %v262 = vand.u32 2147483647, %v252
  %vm263 = vcmp.eq.f32.partialorder %v262, 8.507059e+37
  %v264 = vand.u32 %v252, 2147483648
  %v265 = vor.u32 1.1754944e-38, %v264
  %v266 = vsel %vm263, %v265, %v261
  %v267 = vmul.f32 1.0, %v266
  %v268 = vtanh.pop %v247
  %v269 = vmul.f32 %v267, %v213
  %271 = vrot.lane.b32.xlu0 %v268, 64
  %v272 = vpop.permute.xlu0 %271
  %v274 = vmul.f32 %v267, %v272
  %276 = vrot.lane.b32.xlu0 %v274, 32
  %v277 = vpop.permute.xlu0 %276
  %v279 = vadd.f32 %v269, %v277
  %v280 = vtanh.pop %v279
  %282 = vrot.lane.b32.xlu0 %v280, 64
  %v283 = vpop.permute.xlu0 %282
  %v285 = vmul.f32 %v267, %v283
  %287 = vrot.lane.b32.xlu0 %v285, 32
  %v288 = vpop.permute.xlu0 %287
  %v289 = vrot.slane %v73, 3
  %v290 = vrot.slane %v76, 2
  %v291 = vsel %vm87, %v290, %v289
  %v293 = vsel %vm90, %v288, 0
  %295 = vmatpush.msra.mxu0 0.0
  %296 = vmatpush.msra.mxu0 0.0
  %297 = vmatpush.msra.mxu0 0.0
  %298 = vmatpush.msra.mxu0 0.0
  %299 = vmatpush.msra.mxu0 0.0
  %300 = vmatpush.msra.mxu0 0.0
  %301 = vmatpush.msra.mxu0 0.0
  %302 = vmatpush.msra.mxu0 0.0
  %303 = vmatpush.msra.mxu0 0.0
  %304 = vmatpush.msra.mxu0 0.0
  %305 = vmatpush.msra.mxu0 0.0
  %306 = vmatpush.msra.mxu0 0.0
  %307 = vmatpush.msra.mxu0 %v81
  %308 = vmatpush.msra.mxu0 %v80
  %309 = vmatpush.msra.mxu0 %v79
  %310 = vmatpush.msra.mxu0 %v78
  %311 = vmatmul.f32.gmra.mxu0 %v293
  %v312 = vpop.f32.mrf.mxu0
  %v313 = vadd.f32 %v291, %v312
  %314 = vdwg.mxu0
  %v315 = vxor.u32 %v313, 2147483648
  %v316 = vmul.f32 %v315, 1.442695
  %v317 = vpow.pop %v316
  %v318 = vadd.f32 %v317, 1.0
  %v319 = vrcp.pop %v318
  %v320 = vmul.f32 %v318, %v319
  %v321 = vsub.f32 1.0, %v320
  %v322 = vmul.f32 %v319, %v321
  %v323 = vadd.f32 %v319, %v322
  %vm324 = vweird.f32 %v318
  %vm325 = vweird.f32 %v319
  %vm326 = vmor %vm324, %vm325
  %v327 = vsel %vm326, %v319, %v323
  %v328 = vand.u32 2147483647, %v318
  %vm329 = vcmp.eq.f32.partialorder %v328, 8.507059e+37
  %v330 = vand.u32 %v318, 2147483648
  %v331 = vor.u32 1.1754944e-38, %v330
  %v332 = vsel %vm329, %v331, %v327
  %v333 = vmul.f32 1.0, %v332
  %v334 = vtanh.pop %v313
  %v335 = vmul.f32 %v333, %v279
  %337 = vrot.lane.b32.xlu0 %v334, 64
  %v338 = vpop.permute.xlu0 %337
  %v340 = vmul.f32 %v333, %v338
  %342 = vrot.lane.b32.xlu0 %v340, 32
  %v343 = vpop.permute.xlu0 %342
  %v345 = vadd.f32 %v335, %v343
  %v346 = vtanh.pop %v345
  %348 = vrot.lane.b32.xlu0 %v346, 64
  %v349 = vpop.permute.xlu0 %348
  %v351 = vmul.f32 %v333, %v349
  %353 = vrot.lane.b32.xlu0 %v351, 32
  %v354 = vpop.permute.xlu0 %353
  %v355 = vrot.slane %v73, 4
  %v356 = vrot.slane %v76, 3
  %v357 = vsel %vm87, %v356, %v355
  %v359 = vsel %vm90, %v354, 0
  %361 = vmatpush.msra.mxu0 0.0
  %362 = vmatpush.msra.mxu0 0.0
  %363 = vmatpush.msra.mxu0 0.0
  %364 = vmatpush.msra.mxu0 0.0
  %365 = vmatpush.msra.mxu0 0.0
  %366 = vmatpush.msra.mxu0 0.0
  %367 = vmatpush.msra.mxu0 0.0
  %368 = vmatpush.msra.mxu0 0.0
  %369 = vmatpush.msra.mxu0 0.0
  %370 = vmatpush.msra.mxu0 0.0
  %371 = vmatpush.msra.mxu0 0.0
  %372 = vmatpush.msra.mxu0 0.0
  %373 = vmatpush.msra.mxu0 %v81
  %374 = vmatpush.msra.mxu0 %v80
  %375 = vmatpush.msra.mxu0 %v79
  %376 = vmatpush.msra.mxu0 %v78
  %377 = vmatmul.f32.gmra.mxu0 %v359
  %v378 = vpop.f32.mrf.mxu0
  %v379 = vadd.f32 %v357, %v378
  %380 = vdwg.mxu0
  %v381 = vxor.u32 %v379, 2147483648
  %v382 = vmul.f32 %v381, 1.442695
  %v383 = vpow.pop %v382
  %v384 = vadd.f32 %v383, 1.0
  %v385 = vrcp.pop %v384
  %v386 = vmul.f32 %v384, %v385
  %v387 = vsub.f32 1.0, %v386
  %v388 = vmul.f32 %v385, %v387
  %v389 = vadd.f32 %v385, %v388
  %vm390 = vweird.f32 %v384
  %vm391 = vweird.f32 %v385
  %vm392 = vmor %vm390, %vm391
  %v393 = vsel %vm392, %v385, %v389
  %v394 = vand.u32 2147483647, %v384
  %vm395 = vcmp.eq.f32.partialorder %v394, 8.507059e+37
  %v396 = vand.u32 %v384, 2147483648
  %v397 = vor.u32 1.1754944e-38, %v396
  %v398 = vsel %vm395, %v397, %v393
  %v399 = vmul.f32 1.0, %v398
  %v400 = vtanh.pop %v379
  %v401 = vmul.f32 %v399, %v345
  %403 = vrot.lane.b32.xlu0 %v400, 64
  %v404 = vpop.permute.xlu0 %403
  %v406 = vmul.f32 %v399, %v404
  %408 = vrot.lane.b32.xlu0 %v406, 32
  %v409 = vpop.permute.xlu0 %408
  %v411 = vadd.f32 %v401, %v409
  %v412 = vtanh.pop %v411
  %414 = vrot.lane.b32.xlu0 %v412, 64
  %v415 = vpop.permute.xlu0 %414
  %v417 = vmul.f32 %v399, %v415
  %419 = vrot.lane.b32.xlu0 %v417, 32
  %v420 = vpop.permute.xlu0 %419
  %v421 = vrot.slane %v73, 5
  %v422 = vrot.slane %v76, 4
  %v423 = vsel %vm87, %v422, %v421
  %v425 = vsel %vm90, %v420, 0
  %427 = vmatpush.msra.mxu0 0.0
  %428 = vmatpush.msra.mxu0 0.0
  %429 = vmatpush.msra.mxu0 0.0
  %430 = vmatpush.msra.mxu0 0.0
  %431 = vmatpush.msra.mxu0 0.0
  %432 = vmatpush.msra.mxu0 0.0
  %433 = vmatpush.msra.mxu0 0.0
  %434 = vmatpush.msra.mxu0 0.0
  %435 = vmatpush.msra.mxu0 0.0
  %436 = vmatpush.msra.mxu0 0.0
  %437 = vmatpush.msra.mxu0 0.0
  %438 = vmatpush.msra.mxu0 0.0
  %439 = vmatpush.msra.mxu0 %v81
  %440 = vmatpush.msra.mxu0 %v80
  %441 = vmatpush.msra.mxu0 %v79
  %442 = vmatpush.msra.mxu0 %v78
  %443 = vmatmul.f32.gmra.mxu0 %v425
  %v444 = vpop.f32.mrf.mxu0
  %v445 = vadd.f32 %v423, %v444
  %446 = vdwg.mxu0
  %v447 = vxor.u32 %v445, 2147483648
  %v448 = vmul.f32 %v447, 1.442695
  %v449 = vpow.pop %v448
  %v450 = vadd.f32 %v449, 1.0
  %v451 = vrcp.pop %v450
  %v452 = vmul.f32 %v450, %v451
  %v453 = vsub.f32 1.0, %v452
  %v454 = vmul.f32 %v451, %v453
  %v455 = vadd.f32 %v451, %v454
  %vm456 = vweird.f32 %v450
  %vm457 = vweird.f32 %v451
  %vm458 = vmor %vm456, %vm457
  %v459 = vsel %vm458, %v451, %v455
  %v460 = vand.u32 2147483647, %v450
  %vm461 = vcmp.eq.f32.partialorder %v460, 8.507059e+37
  %v462 = vand.u32 %v450, 2147483648
  %v463 = vor.u32 1.1754944e-38, %v462
  %v464 = vsel %vm461, %v463, %v459
  %v465 = vmul.f32 1.0, %v464
  %v466 = vtanh.pop %v445
  %v467 = vmul.f32 %v465, %v411
  %469 = vrot.lane.b32.xlu0 %v466, 64
  %v470 = vpop.permute.xlu0 %469
  %v472 = vmul.f32 %v465, %v470
  %474 = vrot.lane.b32.xlu0 %v472, 32
  %v475 = vpop.permute.xlu0 %474
  %v477 = vadd.f32 %v467, %v475
  %v478 = vtanh.pop %v477
  %480 = vrot.lane.b32.xlu0 %v478, 64
  %v481 = vpop.permute.xlu0 %480
  %v483 = vmul.f32 %v465, %v481
  %485 = vrot.lane.b32.xlu0 %v483, 32
  %v486 = vpop.permute.xlu0 %485
  %v487 = vrot.slane %v73, 6
  %v488 = vrot.slane %v76, 5
  %v489 = vsel %vm87, %v488, %v487
  %v491 = vsel %vm90, %v486, 0
  %493 = vmatpush.msra.mxu0 0.0
  %494 = vmatpush.msra.mxu0 0.0
  %495 = vmatpush.msra.mxu0 0.0
  %496 = vmatpush.msra.mxu0 0.0
  %497 = vmatpush.msra.mxu0 0.0
  %498 = vmatpush.msra.mxu0 0.0
  %499 = vmatpush.msra.mxu0 0.0
  %500 = vmatpush.msra.mxu0 0.0
  %501 = vmatpush.msra.mxu0 0.0
  %502 = vmatpush.msra.mxu0 0.0
  %503 = vmatpush.msra.mxu0 0.0
  %504 = vmatpush.msra.mxu0 0.0
  %505 = vmatpush.msra.mxu0 %v81
  %506 = vmatpush.msra.mxu0 %v80
  %507 = vmatpush.msra.mxu0 %v79
  %508 = vmatpush.msra.mxu0 %v78
  %509 = vmatmul.f32.gmra.mxu0 %v491
  %v510 = vpop.f32.mrf.mxu0
  %v511 = vadd.f32 %v489, %v510
  %512 = vdwg.mxu0
  %v513 = vxor.u32 %v511, 2147483648
  %v514 = vmul.f32 %v513, 1.442695
  %v515 = vpow.pop %v514
  %v516 = vadd.f32 %v515, 1.0
  %v517 = vrcp.pop %v516
  %v518 = vmul.f32 %v516, %v517
  %v519 = vsub.f32 1.0, %v518
  %v520 = vmul.f32 %v517, %v519
  %v521 = vadd.f32 %v517, %v520
  %vm522 = vweird.f32 %v516
  %vm523 = vweird.f32 %v517
  %vm524 = vmor %vm522, %vm523
  %v525 = vsel %vm524, %v517, %v521
  %v526 = vand.u32 2147483647, %v516
  %vm527 = vcmp.eq.f32.partialorder %v526, 8.507059e+37
  %v528 = vand.u32 %v516, 2147483648
  %v529 = vor.u32 1.1754944e-38, %v528
  %v530 = vsel %vm527, %v529, %v525
  %v531 = vmul.f32 1.0, %v530
  %v532 = vtanh.pop %v511
  %v533 = vmul.f32 %v531, %v477
  %535 = vrot.lane.b32.xlu0 %v532, 64
  %v536 = vpop.permute.xlu0 %535
  %v538 = vmul.f32 %v531, %v536
  %540 = vrot.lane.b32.xlu0 %v538, 32
  %v541 = vpop.permute.xlu0 %540
  %v543 = vadd.f32 %v533, %v541
  %v544 = vtanh.pop %v543
  %546 = vrot.lane.b32.xlu0 %v544, 64
  %v547 = vpop.permute.xlu0 %546
  %v549 = vmul.f32 %v531, %v547
  %551 = vrot.lane.b32.xlu0 %v549, 32
  %v552 = vpop.permute.xlu0 %551
  %v553 = vrot.slane %v73, 7
  %v554 = vrot.slane %v76, 6
  %v555 = vsel %vm87, %v554, %v553
  %v557 = vsel %vm90, %v552, 0
  %559 = vmatpush.msra.mxu0 0.0
  %560 = vmatpush.msra.mxu0 0.0
  %561 = vmatpush.msra.mxu0 0.0
  %562 = vmatpush.msra.mxu0 0.0
  %563 = vmatpush.msra.mxu0 0.0
  %564 = vmatpush.msra.mxu0 0.0
  %565 = vmatpush.msra.mxu0 0.0
  %566 = vmatpush.msra.mxu0 0.0
  %567 = vmatpush.msra.mxu0 0.0
  %568 = vmatpush.msra.mxu0 0.0
  %569 = vmatpush.msra.mxu0 0.0
  %570 = vmatpush.msra.mxu0 0.0
  %571 = vmatpush.msra.mxu0 %v81
  %572 = vmatpush.msra.mxu0 %v80
  %573 = vmatpush.msra.mxu0 %v79
  %574 = vmatpush.msra.mxu0 %v78
  %575 = vmatmul.f32.gmra.mxu0 %v557
  %v576 = vpop.f32.mrf.mxu0
  %v577 = vadd.f32 %v555, %v576
  %578 = vdwg.mxu0
  %v579 = vxor.u32 %v577, 2147483648
  %v580 = vmul.f32 %v579, 1.442695
  %v581 = vpow.pop %v580
  %v582 = vadd.f32 %v581, 1.0
  %v583 = vrcp.pop %v582
  %v584 = vmul.f32 %v582, %v583
  %v585 = vsub.f32 1.0, %v584
  %v586 = vmul.f32 %v583, %v585
  %v587 = vadd.f32 %v583, %v586
  %vm588 = vweird.f32 %v582
  %vm589 = vweird.f32 %v583
  %vm590 = vmor %vm588, %vm589
  %v591 = vsel %vm590, %v583, %v587
  %v592 = vand.u32 2147483647, %v582
  %vm593 = vcmp.eq.f32.partialorder %v592, 8.507059e+37
  %v594 = vand.u32 %v582, 2147483648
  %v595 = vor.u32 1.1754944e-38, %v594
  %v596 = vsel %vm593, %v595, %v591
  %v597 = vmul.f32 1.0, %v596
  %v598 = vtanh.pop %v577
  %v599 = vmul.f32 %v597, %v543
  %601 = vrot.lane.b32.xlu0 %v598, 64
  %v602 = vpop.permute.xlu0 %601
  %v604 = vmul.f32 %v597, %v602
  %606 = vrot.lane.b32.xlu0 %v604, 32
  %v607 = vpop.permute.xlu0 %606
  %v609 = vadd.f32 %v599, %v607
  %v610 = vtanh.pop %v609
  %612 = vrot.lane.b32.xlu0 %v610, 64
  %v613 = vpop.permute.xlu0 %612
  %v615 = vmul.f32 %v597, %v613
  %v616 = vld [vmem:[%s6] sm:$0xff]
  %v617 = vld [vmem:[%s6 + $0x8] sm:$0xff]
  %v618 = vld [vmem:[%s6 + $0x10] sm:$0xff]
  %v619 = vld [vmem:[%s6 + $0x18] sm:$0xff]
  %v620 = vld [vmem:[%s7] sm:$0x1]
  %v622 = vperm.slane %v620, 0
  %625 = vrot.lane.b32.xlu0 %v615, 32
  %v626 = vpop.permute.xlu0 %625
  %v627 = vsel %vm90, %v626, 0
  %629 = vmatpush.msra.mxu0 0.0
  %630 = vmatpush.msra.mxu0 0.0
  %631 = vmatpush.msra.mxu0 0.0
  %632 = vmatpush.msra.mxu0 0.0
  %633 = vmatpush.msra.mxu0 0.0
  %634 = vmatpush.msra.mxu0 0.0
  %635 = vmatpush.msra.mxu0 0.0
  %636 = vmatpush.msra.mxu0 0.0
  %637 = vmatpush.msra.mxu0 0.0
  %638 = vmatpush.msra.mxu0 0.0
  %639 = vmatpush.msra.mxu0 0.0
  %640 = vmatpush.msra.mxu0 0.0
  %641 = vmatpush.msra.mxu0 %v619
  %642 = vmatpush.msra.mxu0 %v618
  %643 = vmatpush.msra.mxu0 %v617
  %644 = vmatpush.msra.mxu0 %v616
  %645 = vmatmul.f32.gmra.mxu0 %v627
  %v646 = vpop.f32.mrf.mxu0
  %v647 = vadd.f32 %v622, %v646
  %648 = vdwg.mxu0
  %v649 = vxor.u32 %v647, 2147483648
  %v650 = vmul.f32 %v649, 1.442695
  %v651 = vpow.pop %v650
  %v652 = vadd.f32 %v651, 1.0
  %v653 = vrcp.pop %v652
  %v654 = vmul.f32 %v652, %v653
  %v655 = vsub.f32 1.0, %v654
  %v656 = vmul.f32 %v653, %v655
  %v657 = vadd.f32 %v653, %v656
  %vm658 = vweird.f32 %v652
  %vm659 = vweird.f32 %v653
  %vm660 = vmor %vm658, %vm659
  %v661 = vsel %vm660, %v653, %v657
  %v662 = vand.u32 2147483647, %v652
  %vm663 = vcmp.eq.f32.partialorder %v662, 8.507059e+37
  %v664 = vand.u32 %v652, 2147483648
  %v665 = vor.u32 1.1754944e-38, %v664
  %v666 = vsel %vm663, %v665, %v661
  %v667 = vmul.f32 1.0, %v666
  %v668 = vld [vmem:[%s8] sm:$0xff]
  %v669 = vld [vmem:[%s8 + $0x8] sm:$0xff]
  %v670 = vld [vmem:[#allocation2] sm:$0x1]
  %v672 = vperm.slane %v670, 0
  %vm674 = vcmask 130048
  %v676 = vsel %vm674, %v667, 0
  %678 = vmatpush.msra.mxu0 0.0
  %679 = vmatpush.msra.mxu0 0.0
  %680 = vmatpush.msra.mxu0 0.0
  %681 = vmatpush.msra.mxu0 0.0
  %682 = vmatpush.msra.mxu0 0.0
  %683 = vmatpush.msra.mxu0 0.0
  %684 = vmatpush.msra.mxu0 0.0
  %685 = vmatpush.msra.mxu0 0.0
  %686 = vmatpush.msra.mxu0 0.0
  %687 = vmatpush.msra.mxu0 0.0
  %688 = vmatpush.msra.mxu0 0.0
  %689 = vmatpush.msra.mxu0 0.0
  %690 = vmatpush.msra.mxu0 0.0
  %691 = vmatpush.msra.mxu0 0.0
  %692 = vmatpush.msra.mxu0 %v669
  %693 = vmatpush.msra.mxu0 %v668
  %694 = vmatmul.f32.gmra.mxu0 %v676
  %v695 = vpop.f32.mrf.mxu0
  %v696 = vadd.f32 %v672, %v695
  %697 = vdwg.mxu0
  %v698 = vxor.u32 %v696, 2147483648
  %v699 = vmul.f32 %v698, 1.442695
  %v700 = vpow.pop %v699
  %v701 = vadd.f32 %v700, 1.0
  %v702 = vrcp.pop %v701
  %v703 = vmul.f32 %v701, %v702
  %v704 = vsub.f32 1.0, %v703
  %v705 = vmul.f32 %v702, %v704
  %v706 = vadd.f32 %v702, %v705
  %vm707 = vweird.f32 %v701
  %vm708 = vweird.f32 %v702
  %vm709 = vmor %vm707, %vm708
  %v710 = vsel %vm709, %v702, %v706
  %v711 = vand.u32 2147483647, %v701
  %vm712 = vcmp.eq.f32.partialorder %v711, 8.507059e+37
  %v713 = vand.u32 %v701, 2147483648
  %v714 = vor.u32 1.1754944e-38, %v713
  %v715 = vsel %vm712, %v714, %v710
  %v716 = vmul.f32 1.0, %v715
  %vm717 = vcmask 1024
  %718 = vst.msk [vmem:[%s10] sm:$0x3] %vm717, %v716
  // Predicated region
  $region42: #{tpu_custom_call.1} parent=0 // pred_check
    _
  $region43: #{tpu_custom_call.1} parent=0 // pred_check_branch
    %720 = sbr.rel (0) target = $region45
  $region44: #{tpu_custom_call.1} parent=0 // pred_region
    _
  $region45: #{tpu_custom_call.1} parent=0 // pred_fallthru
    _
  // Predicated region
  $region46: #{tpu_custom_call.1} parent=0 // pred_check
    _
  $region47: #{tpu_custom_call.1} parent=0 // pred_check_branch
    %722 = sbr.rel (0) target = $region49
  $region48: #{tpu_custom_call.1} parent=0 // pred_region
    _
  $region49: #{tpu_custom_call.1} parent=0 // pred_fallthru
    _

</llo_original>
